<compile_context>
chip_gen: v7x
topology: tpu7x:2x2x1
jax: 0.10.0
libtpu: 0.0.40
codegen_flags: <defaults>
</compile_context>

<pallas_src>
import functools
import math

import jax
import jax.numpy as jnp
import numpy as np
from jax.experimental import pallas as pl
from jax.experimental.pallas import tpu as pltpu


# --------------------------------------------------------------------------
# Pallas kernel: gather as a one-hot matmul whose rhs panel is built on the
# fly (never materialized in HBM, never resident as a full (HW, HW) slab).
#
#   out[r, c] = xflat[r, flat_idx[c]] = sum_s xflat[r, s] * (s == flat_idx[c])
#
# Grid: (BC // rb, HW // cb, HW // kb); reduction (K) axis last, "arbitrary".
# --------------------------------------------------------------------------
def _gather_kernel(idx_ref, x_ref, out_ref, acc_ref):
    # idx_ref: (1, cb)  int32 -- flat source indices of this column panel
    # x_ref:   (rb, kb) f32   -- lhs row block, K-tile of the flat spatial axis
    # out_ref: (rb, cb) f32
    # acc_ref: (rb, cb) f32   -- VMEM accumulator scratch
    k = pl.program_id(2)

    @pl.when(k == 0)
    def _():
        acc_ref[...] = jnp.zeros_like(acc_ref)

    rb, kb = x_ref.shape
    cb = idx_ref.shape[1]
    # On-the-fly 0/1 rhs panel: onehot[s, c] = (k*kb + s == flat_idx[c]).
    src = jax.lax.broadcasted_iota(jnp.int32, (kb, cb), 0) + k * kb
    onehot = (src == idx_ref[...]).astype(jnp.float32)
    acc_ref[...] += jnp.dot(x_ref[...], onehot,
                            preferred_element_type=jnp.float32)

    @pl.when(k == pl.num_programs(2) - 1)
    def _():
        out_ref[...] = acc_ref[...].astype(out_ref.dtype)


def _divisor_block(dim, cap, align):
    """Largest divisor of `dim` that is <= cap and a multiple of `align`;
    falls back to the full dim (always layout-legal as a block shape)."""
    if dim <= align:
        return dim
    best = None
    for cand in range(align, min(dim, cap) + 1, align):
        if dim % cand == 0:
            best = cand
    return best if best is not None else dim


def _vmem_bytes_estimate(rb, cb, kb):
    return 4 * (2 * rb * kb      # double-buffered lhs blocks
                + 2 * cb         # double-buffered idx panels (int32)
                + 3 * rb * cb    # double-buffered out blocks + accumulator
                + 2 * kb * cb)   # on-the-fly one-hot + compare temporaries


_VMEM_BUDGET = 40 << 20          # fits v5e/v6e (128 MiB) and v7x (64 MiB) phys


def _select_blocks(BC, HW):
    rb = _divisor_block(BC, 256, 8)       # MXU M-starvation for tiny B*C is
                                          # accepted; DMA/store is the binder.
    cb = _divisor_block(HW, 512, 128)     # lane-dense (>=128) output panels
    kb = HW                               # full-K: lhs row block read once,
                                          # resident across column panels
    if _vmem_bytes_estimate(rb, cb, kb) > _VMEM_BUDGET:
        kb = _divisor_block(HW, 1024, 128)    # K-tile the reduction (big HW)
    while _vmem_bytes_estimate(rb, cb, kb) > _VMEM_BUDGET and cb % 256 == 0:
        cb //= 2
    while _vmem_bytes_estimate(rb, cb, kb) > _VMEM_BUDGET and rb % 16 == 0:
        rb //= 2
    return rb, cb, kb


def _gather(xflat, flat_idx):
    BC, HW = xflat.shape
    rb, cb, kb = _select_blocks(BC, HW)
    grid = (BC // rb, HW // cb, HW // kb)

    est = _vmem_bytes_estimate(rb, cb, kb)
    vmem_limit = int(min(64 << 20, max(32 << 20, 3 * est // 2)))

    # Real traffic of the fused-rhs formulation (no (HW, HW) operand at all).
    # The lhs is re-streamed once per column panel only when K is tiled; with
    # kb == HW its block index is constant across panels and the copy elides.
    lhs_passes = 1 if kb == HW else (HW // cb)
    cost = pl.CostEstimate(
        flops=2 * BC * HW * HW,
        transcendentals=0,
        bytes_accessed=4 * (BC * HW * lhs_passes     # lhs reads
                            + HW * (BC // rb)        # idx panel reads
                            + BC * HW),              # output writes
    )
    return pl.pallas_call(
        _gather_kernel,
        out_shape=jax.ShapeDtypeStruct((BC, HW), jnp.float32),
        grid_spec=pltpu.PrefetchScalarGridSpec(
            num_scalar_prefetch=0,
            grid=grid,
            in_specs=[
                pl.BlockSpec((1, cb), lambda i, j, k: (0, j)),     # flat_idx
                pl.BlockSpec((rb, kb), lambda i, j, k: (i, k)),    # xflat
            ],
            out_specs=pl.BlockSpec((rb, cb), lambda i, j, k: (i, j)),
            scratch_shapes=[pltpu.VMEM((rb, cb), jnp.float32)],
        ),
        compiler_params=pltpu.CompilerParams(
            dimension_semantics=("parallel", "parallel", "arbitrary"),
            vmem_limit_bytes=vmem_limit),
        cost_estimate=cost,
    )(flat_idx, xflat)


# --------------------------------------------------------------------------
# Offset conv + deformed integer grid (tiny, O(C*H*W)) -- plain XLA per the
# perf review; only the batch-0 offsets are used by the PyTorch forward.
# --------------------------------------------------------------------------
def _flat_gather_indices(x, weight, bias, pad):
    _, _, H, W = x.shape
    max_off = max(H, W) / 4.0
    off = jax.lax.conv_general_dilated(
        x[:1], weight.astype(jnp.float32), window_strides=(1, 1),
        padding=((pad, pad), (pad, pad)),
        dimension_numbers=("NCHW", "OIHW", "NCHW"),
        precision=jax.lax.Precision.HIGHEST)
    off = off + bias.astype(jnp.float32)[None, :, None, None]
    off = jnp.clip(off, -max_off, max_off)
    x_off, y_off = off[0, 0], off[0, 1]

    xg = jnp.arange(H, dtype=jnp.float32)[:, None] + x_off
    yg = jnp.arange(W, dtype=jnp.float32)[None, :] + y_off
    xi = xg.astype(jnp.int32)                 # trunc toward zero == torch .to(long)
    xi = jnp.where(xi >= H, H - 1, xi)
    xi = jnp.where(xi < 0, xi + H, xi)        # torch negative advanced-index wrap
    yi = yg.astype(jnp.int32)
    yi = jnp.where(yi >= W, W - 1, yi)
    yi = jnp.where(yi < 0, yi + W, yi)
    return (xi * W + yi).reshape(1, H * W)    # (1, HW) int32 in [0, HW)


# --------------------------------------------------------------------------
# Public wrapper: NCHW in / NCHW out, matching DeformableGrid.forward.
# --------------------------------------------------------------------------
@functools.partial(jax.jit, static_argnames=("kernel_size",))
def deformable_grid(x, weight, bias, *, kernel_size=3):
    B, C, H, W = x.shape
    pad = kernel_size // 2                    # module default: padding=1, stride=1
    orig_dtype = x.dtype
    xf = x.astype(jnp.float32)

    flat_idx = _flat_gather_indices(xf, weight, bias, pad)   # (1, HW) int32
    xflat = xf.reshape(B * C, H * W)                         # (B*C, HW)
    out_flat = _gather(xflat, flat_idx)                      # (B*C, HW)
    return out_flat.reshape(B, C, H, W).astype(orig_dtype)


# --------------------------------------------------------------------------
# Init + pure-JAX reference (mirrors the PyTorch module) + self-test.
# --------------------------------------------------------------------------
def init_params(key, in_channels, kernel_size=3):
    """kaiming_uniform_(a=sqrt(5)) weight + uniform(-1/sqrt(fan_in)) bias."""
    fan_in = in_channels * kernel_size * kernel_size
    bound = 1.0 / math.sqrt(fan_in)
    kw, kb = jax.random.split(key)
    w = jax.random.uniform(kw, (2, in_channels, kernel_size, kernel_size),
                           jnp.float32, minval=-bound, maxval=bound)
    b = jax.random.uniform(kb, (2,), jnp.float32, minval=-bound, maxval=bound)
    return w, b


def deformable_grid_reference(x, weight, bias, kernel_size=3):
    B, C, H, W = x.shape
    pad = kernel_size // 2
    max_off = max(H, W) / 4.0
    off = jax.lax.conv_general_dilated(
        x, weight.astype(jnp.float32), window_strides=(1, 1),
        padding=((pad, pad), (pad, pad)),
        dimension_numbers=("NCHW", "OIHW", "NCHW"),
        precision=jax.lax.Precision.HIGHEST)
    off = off + bias.astype(jnp.float32)[None, :, None, None]
    off = jnp.clip(off, -max_off, max_off)
    xo, yo = off[0, 0], off[0, 1]
    xg = jnp.arange(H, dtype=jnp.float32)[:, None] + xo
    yg = jnp.arange(W, dtype=jnp.float32)[None, :] + yo
    xi = xg.astype(jnp.int32)
    xi = jnp.where(xi >= H, H - 1, xi)
    xi = jnp.where(xi < 0, xi + H, xi)
    yi = yg.astype(jnp.int32)
    yi = jnp.where(yi >= W, W - 1, yi)
    yi = jnp.where(yi < 0, yi + W, yi)
    return x[:, :, xi, yi]


def _run_case(key, B, C, H, W, kernel_size=3):
    kx, kp = jax.random.split(key)
    x = jax.random.normal(kx, (B, C, H, W), dtype=jnp.float32)
    w, b = init_params(kp, C, kernel_size=kernel_size)
    out = jax.block_until_ready(deformable_grid(x, w, b, kernel_size=kernel_size))
    ref = deformable_grid_reference(x, w, b, kernel_size=kernel_size)
    assert out.shape == (B, C, H, W)
    np.testing.assert_allclose(np.asarray(out), np.asarray(ref),
                               rtol=1e-5, atol=1e-5)


if __name__ == "__main__":
    key = jax.random.PRNGKey(0)
    k1, k2 = jax.random.split(key)
    _run_case(k1, 2, 4, 16, 16)     # module-sized smoke test (grid 1x1x1)
    _run_case(k2, 2, 4, 32, 32)     # multi-column-panel path (grid 1x2x1)
    print("KERNEL_OK")
</pallas_src>

<mosaic_0001>
module attributes {stable_mosaic.version = 11 : i64} {
  func.func @_gather_kernel(%arg0: i32, %arg1: i32, %arg2: i32, %arg3: memref<1x256xi32, #tpu.memory_space<vmem>>, %arg4: memref<8x256xf32, #tpu.memory_space<vmem>>, %arg5: memref<8x256xf32, #tpu.memory_space<vmem>>, %arg6: memref<8x256xf32, #tpu.memory_space<vmem>>) attributes {dimension_semantics = [#tpu.dimension_semantics<parallel>, #tpu.dimension_semantics<parallel>, #tpu.dimension_semantics<arbitrary>], iteration_bounds = array<i64: 1, 1, 1>, scalar_prefetch = 0 : i64, scratch_operands = 1 : i64, tpu.core_type = #tpu.core_type<tc>, window_params = [{transform_indices = @transform_0, window_bounds = array<i64: 1, 256>}, {transform_indices = @transform_1, window_bounds = array<i64: 8, 256>}, {transform_indices = @transform_2, window_bounds = array<i64: 8, 256>}]} {
    %c0_i32 = arith.constant 0 : i32
    %0 = arith.cmpi eq, %arg2, %c0_i32 : i32
    %1 = arith.extui %0 : i1 to i32
    %c0_i32_0 = arith.constant 0 : i32
    %2 = arith.cmpi ne, %1, %c0_i32_0 : i32
    scf.if %2 {
      %cst_10 = arith.constant 0.000000e+00 : f32
      %20 = vector.broadcast %cst_10 : f32 to vector<8x256xf32>
      %c0_11 = arith.constant 0 : index
      %c0_12 = arith.constant 0 : index
      %21 = vector.load %arg6[%c0_11, %c0_12] : memref<8x256xf32, #tpu.memory_space<vmem>>, vector<8x256xf32>
      tpu.vector_store %arg6[%c0_11, %c0_12], %20 {strides = array<i32>} : memref<8x256xf32, #tpu.memory_space<vmem>>, vector<8x256xf32>,
    } else {
    }
    %3 = tpu.iota {dimensions = array<i32: 0>} : vector<256x256xi32>
    %c256_i32 = arith.constant 256 : i32
    %4 = arith.muli %arg2, %c256_i32 : i32
    %5 = vector.broadcast %4 : i32 to vector<256x256xi32>
    %6 = arith.addi %3, %5 : vector<256x256xi32>
    %c0 = arith.constant 0 : index
    %c0_1 = arith.constant 0 : index
    %7 = vector.load %arg3[%c0, %c0_1] : memref<1x256xi32, #tpu.memory_space<vmem>>, vector<1x256xi32>
    %8 = vector.broadcast %7 : vector<1x256xi32> to vector<256x256xi32>
    %9 = arith.cmpi eq, %6, %8 : vector<256x256xi32>
    %10 = arith.extui %9 : vector<256x256xi1> to vector<256x256xi32>
    %11 = arith.sitofp %10 : vector<256x256xi32> to vector<256x256xf32>
    %c0_2 = arith.constant 0 : index
    %c0_3 = arith.constant 0 : index
    %12 = vector.load %arg6[%c0_2, %c0_3] : memref<8x256xf32, #tpu.memory_space<vmem>>, vector<8x256xf32>
    %c0_4 = arith.constant 0 : index
    %c0_5 = arith.constant 0 : index
    %13 = vector.load %arg4[%c0_4, %c0_5] : memref<8x256xf32, #tpu.memory_space<vmem>>, vector<8x256xf32>
    %cst = arith.constant dense<0.000000e+00> : vector<8x256xf32>
    %14 = tpu.matmul %13, %11, %cst {dimension_numbers = #tpu.dot_dimension_numbers<[1], [0], [0], [1], [0, 0, 1, 1], [], []>} : vector<8x256xf32>, vector<256x256xf32>, vector<8x256xf32> -> vector<8x256xf32>
    %15 = arith.addf %12, %14 : vector<8x256xf32>
    %c0_6 = arith.constant 0 : index
    %c0_7 = arith.constant 0 : index
    %16 = vector.load %arg6[%c0_6, %c0_7] : memref<8x256xf32, #tpu.memory_space<vmem>>, vector<8x256xf32>
    tpu.vector_store %arg6[%c0_6, %c0_7], %15 {strides = array<i32>} : memref<8x256xf32, #tpu.memory_space<vmem>>, vector<8x256xf32>,
    %c0_i32_8 = arith.constant 0 : i32
    %17 = arith.cmpi eq, %arg2, %c0_i32_8 : i32
    %18 = arith.extui %17 : i1 to i32
    %c0_i32_9 = arith.constant 0 : i32
    %19 = arith.cmpi ne, %18, %c0_i32_9 : i32
    scf.if %19 {
      %c0_10 = arith.constant 0 : index
      %c0_11 = arith.constant 0 : index
      %20 = vector.load %arg6[%c0_10, %c0_11] : memref<8x256xf32, #tpu.memory_space<vmem>>, vector<8x256xf32>
      %c0_12 = arith.constant 0 : index
      %c0_13 = arith.constant 0 : index
      %21 = vector.load %arg5[%c0_12, %c0_13] : memref<8x256xf32, #tpu.memory_space<vmem>>, vector<8x256xf32>
      tpu.vector_store %arg5[%c0_12, %c0_13], %20 {strides = array<i32>} : memref<8x256xf32, #tpu.memory_space<vmem>>, vector<8x256xf32>,
    } else {
    }
    return
  }
  func.func @transform_0(%arg0: i32, %arg1: i32, %arg2: i32) -> (i32, i32) {
    %c0_i32 = arith.constant 0 : i32
    %c0_i32_0 = arith.constant 0 : i32
    return %c0_i32, %arg1 : i32, i32
  }
  func.func @transform_1(%arg0: i32, %arg1: i32, %arg2: i32) -> (i32, i32) {
    %c0_i32 = arith.constant 0 : i32
    return %arg0, %arg2 : i32, i32
  }
  func.func @transform_2(%arg0: i32, %arg1: i32, %arg2: i32) -> (i32, i32) {
    %c0_i32 = arith.constant 0 : i32
    return %arg0, %arg1 : i32, i32
  }
}

</mosaic_0001>

<llo_original>
// kernel: deformable_grid.1
$region0: #{deformable_grid.1}
  #allocation0 [shape = 'u32[]', space=smem, size = 0x4, offset = 0x4, fixed_abs, tag = 'smem constant byte address 0x4 - core index']
  #allocation1 [shape = 'u32[144,128]{1,0:T(1,128)}', space=vmem, size = 0x12000, scoped, tag = 'internal scratch']
  #allocation2 [shape = 'f32[8,256]{1,0:T(8,128)}', space=vmem, size = 0x2000, scoped, tag = 'scratch operand']
  %s0 = inlined_call_operand.vmem [shape: s32[1,256], index: 0, kind: input, shape index: {}]
  %s1 = inlined_call_operand.vmem [shape: f32[8,256], index: 1, kind: input, shape index: {}]
  %s2 = inlined_call_operand.vmem [shape: f32[8,256], index: 2, kind: output, shape index: {}]
  %s3 = sld [smem:[#allocation0]]
  $region26: #{deformable_grid.1} parent=0
    _
  %s5 = ssub.s32 1, %s3
  %s6 = scalar_select 0, %s5, %s3
  // Predicated region
  $region2: #{deformable_grid.1} parent=0 // pred_check
    _
  $region3: #{deformable_grid.1} parent=0 // pred_check_branch
    %8 = sbr.rel (0) target = $region5
  $region4: #{deformable_grid.1} parent=0 // pred_region
    _
  $region5: #{deformable_grid.1} parent=0 // pred_fallthru
    _
  // Predicated region
  $region6: #{deformable_grid.1} parent=0 // pred_check
    _
  $region7: #{deformable_grid.1} parent=0 // pred_check_branch
    %10 = sbr.rel (0) target = $region9
  $region8: #{deformable_grid.1} parent=0 // pred_region
    _
  $region9: #{deformable_grid.1} parent=0 // pred_fallthru
    _
  %p11 = scmp.eq.s32.totalorder 0, 0
  // Predicated region
  $region10: #{deformable_grid.1} parent=0 // pred_check
    %p12 = pneg %p11
  $region11: #{deformable_grid.1} parent=0 // pred_check_branch
    %14 = sbr.rel (%p12) target = $region13
  $region12: #{deformable_grid.1} parent=0 // pred_region
    %15 = vst [vmem:[#allocation2] sm:$0xff] 0.0
    %16 = vst [vmem:[#allocation2 + $0x8] sm:$0xff] 0.0
  $region13: #{deformable_grid.1} parent=0 // pred_fallthru
    _
  %v17 = vlaneseq
  %v18 = vshrl.u32 %v17, 7
  %v19 = vadd.s32 %v18, 8
  %v20 = vadd.s32 %v18, 16
  %v21 = vadd.s32 %v18, 24
  %v22 = vadd.s32 %v18, 32
  %v23 = vadd.s32 %v18, 40
  %v24 = vadd.s32 %v18, 48
  %v25 = vadd.s32 %v18, 56
  %v26 = vadd.s32 %v18, 64
  %v27 = vadd.s32 %v18, 72
  %v28 = vadd.s32 %v18, 80
  %v29 = vadd.s32 %v18, 88
  %v30 = vadd.s32 %v18, 96
  %v31 = vadd.s32 %v18, 104
  %v32 = vadd.s32 %v18, 112
  %v33 = vadd.s32 %v18, 120
  %v34 = vadd.s32 %v18, 128
  %v35 = vadd.s32 %v18, 136
  %v36 = vadd.s32 %v18, 144
  %v37 = vadd.s32 %v18, 152
  %v38 = vadd.s32 %v18, 160
  %v39 = vadd.s32 %v18, 168
  %v40 = vadd.s32 %v18, 176
  %v41 = vadd.s32 %v18, 184
  %v42 = vadd.s32 %v18, 192
  %v43 = vadd.s32 %v18, 200
  %v44 = vadd.s32 %v18, 208
  %v45 = vadd.s32 %v18, 216
  %v46 = vadd.s32 %v18, 224
  %v47 = vadd.s32 %v18, 232
  %v48 = vadd.s32 %v18, 240
  %v49 = vadd.s32 %v18, 248
  %s50 = smul.u32 0, 256
  %v51 = vstv %s50
  %v52 = vadd.s32 %v18, %v51
  %v53 = vadd.s32 %v19, %v51
  %v54 = vadd.s32 %v20, %v51
  %v55 = vadd.s32 %v21, %v51
  %v56 = vadd.s32 %v22, %v51
  %v57 = vadd.s32 %v23, %v51
  %v58 = vadd.s32 %v24, %v51
  %v59 = vadd.s32 %v25, %v51
  %v60 = vadd.s32 %v26, %v51
  %v61 = vadd.s32 %v27, %v51
  %v62 = vadd.s32 %v28, %v51
  %v63 = vadd.s32 %v29, %v51
  %v64 = vadd.s32 %v30, %v51
  %v65 = vadd.s32 %v31, %v51
  %v66 = vadd.s32 %v32, %v51
  %v67 = vadd.s32 %v33, %v51
  %v68 = vadd.s32 %v34, %v51
  %v69 = vadd.s32 %v35, %v51
  %v70 = vadd.s32 %v36, %v51
  %v71 = vadd.s32 %v37, %v51
  %v72 = vadd.s32 %v38, %v51
  %v73 = vadd.s32 %v39, %v51
  %v74 = vadd.s32 %v40, %v51
  %v75 = vadd.s32 %v41, %v51
  %v76 = vadd.s32 %v42, %v51
  %v77 = vadd.s32 %v43, %v51
  %v78 = vadd.s32 %v44, %v51
  %v79 = vadd.s32 %v45, %v51
  %v80 = vadd.s32 %v46, %v51
  %v81 = vadd.s32 %v47, %v51
  %v82 = vadd.s32 %v48, %v51
  %v83 = vadd.s32 %v49, %v51
  %v84 = vld [vmem:[%s0] sm:$0x3]
  %v85 = vlaneseq
  %v86 = vshrl.u32 %v85, 7
  %v87 = vsub.s32 0, %v86
  %v88 = vrot.slane %v84, %v87
  %v89 = vlaneseq
  %v90 = vshrl.u32 %v89, 7
  %v91 = vsub.s32 1, %v90
  %v92 = vrot.slane %v84, %v91
  %vm93 = vcmp.eq.s32.totalorder %v52, %v88
  %vm94 = vcmp.eq.s32.totalorder %v52, %v92
  %vm95 = vcmp.eq.s32.totalorder %v53, %v88
  %vm96 = vcmp.eq.s32.totalorder %v53, %v92
  %vm97 = vcmp.eq.s32.totalorder %v54, %v88
  %vm98 = vcmp.eq.s32.totalorder %v54, %v92
  %vm99 = vcmp.eq.s32.totalorder %v55, %v88
  %vm100 = vcmp.eq.s32.totalorder %v55, %v92
  %vm101 = vcmp.eq.s32.totalorder %v56, %v88
  %vm102 = vcmp.eq.s32.totalorder %v56, %v92
  %vm103 = vcmp.eq.s32.totalorder %v57, %v88
  %vm104 = vcmp.eq.s32.totalorder %v57, %v92
  %vm105 = vcmp.eq.s32.totalorder %v58, %v88
  %vm106 = vcmp.eq.s32.totalorder %v58, %v92
  %vm107 = vcmp.eq.s32.totalorder %v59, %v88
  %vm108 = vcmp.eq.s32.totalorder %v59, %v92
  %vm109 = vcmp.eq.s32.totalorder %v60, %v88
  %vm110 = vcmp.eq.s32.totalorder %v60, %v92
  %vm111 = vcmp.eq.s32.totalorder %v61, %v88
  %vm112 = vcmp.eq.s32.totalorder %v61, %v92
  %vm113 = vcmp.eq.s32.totalorder %v62, %v88
  %vm114 = vcmp.eq.s32.totalorder %v62, %v92
  %vm115 = vcmp.eq.s32.totalorder %v63, %v88
  %vm116 = vcmp.eq.s32.totalorder %v63, %v92
  %vm117 = vcmp.eq.s32.totalorder %v64, %v88
  %vm118 = vcmp.eq.s32.totalorder %v64, %v92
  %vm119 = vcmp.eq.s32.totalorder %v65, %v88
  %vm120 = vcmp.eq.s32.totalorder %v65, %v92
  %vm121 = vcmp.eq.s32.totalorder %v66, %v88
  %vm122 = vcmp.eq.s32.totalorder %v66, %v92
  %vm123 = vcmp.eq.s32.totalorder %v67, %v88
  %vm124 = vcmp.eq.s32.totalorder %v67, %v92
  %vm125 = vcmp.eq.s32.totalorder %v68, %v88
  %vm126 = vcmp.eq.s32.totalorder %v68, %v92
  %vm127 = vcmp.eq.s32.totalorder %v69, %v88
  %vm128 = vcmp.eq.s32.totalorder %v69, %v92
  %vm129 = vcmp.eq.s32.totalorder %v70, %v88
  %vm130 = vcmp.eq.s32.totalorder %v70, %v92
  %vm131 = vcmp.eq.s32.totalorder %v71, %v88
  %vm132 = vcmp.eq.s32.totalorder %v71, %v92
  %vm133 = vcmp.eq.s32.totalorder %v72, %v88
  %vm134 = vcmp.eq.s32.totalorder %v72, %v92
  %vm135 = vcmp.eq.s32.totalorder %v73, %v88
  %vm136 = vcmp.eq.s32.totalorder %v73, %v92
  %vm137 = vcmp.eq.s32.totalorder %v74, %v88
  %vm138 = vcmp.eq.s32.totalorder %v74, %v92
  %vm139 = vcmp.eq.s32.totalorder %v75, %v88
  %vm140 = vcmp.eq.s32.totalorder %v75, %v92
  %vm141 = vcmp.eq.s32.totalorder %v76, %v88
  %vm142 = vcmp.eq.s32.totalorder %v76, %v92
  %vm143 = vcmp.eq.s32.totalorder %v77, %v88
  %vm144 = vcmp.eq.s32.totalorder %v77, %v92
  %vm145 = vcmp.eq.s32.totalorder %v78, %v88
  %vm146 = vcmp.eq.s32.totalorder %v78, %v92
  %vm147 = vcmp.eq.s32.totalorder %v79, %v88
  %vm148 = vcmp.eq.s32.totalorder %v79, %v92
  %vm149 = vcmp.eq.s32.totalorder %v80, %v88
  %vm150 = vcmp.eq.s32.totalorder %v80, %v92
  %vm151 = vcmp.eq.s32.totalorder %v81, %v88
  %vm152 = vcmp.eq.s32.totalorder %v81, %v92
  %vm153 = vcmp.eq.s32.totalorder %v82, %v88
  %vm154 = vcmp.eq.s32.totalorder %v82, %v92
  %vm155 = vcmp.eq.s32.totalorder %v83, %v88
  %vm156 = vcmp.eq.s32.totalorder %v83, %v92
  %v157 = vsel %vm93, 1, 0
  %v158 = vsel %vm94, 1, 0
  %v159 = vsel %vm95, 1, 0
  %v160 = vsel %vm96, 1, 0
  %v161 = vsel %vm97, 1, 0
  %v162 = vsel %vm98, 1, 0
  %v163 = vsel %vm99, 1, 0
  %v164 = vsel %vm100, 1, 0
  %v165 = vsel %vm101, 1, 0
  %v166 = vsel %vm102, 1, 0
  %v167 = vsel %vm103, 1, 0
  %v168 = vsel %vm104, 1, 0
  %v169 = vsel %vm105, 1, 0
  %v170 = vsel %vm106, 1, 0
  %v171 = vsel %vm107, 1, 0
  %v172 = vsel %vm108, 1, 0
  %v173 = vsel %vm109, 1, 0
  %v174 = vsel %vm110, 1, 0
  %v175 = vsel %vm111, 1, 0
  %v176 = vsel %vm112, 1, 0
  %v177 = vsel %vm113, 1, 0
  %v178 = vsel %vm114, 1, 0
  %v179 = vsel %vm115, 1, 0
  %v180 = vsel %vm116, 1, 0
  %v181 = vsel %vm117, 1, 0
  %v182 = vsel %vm118, 1, 0
  %v183 = vsel %vm119, 1, 0
  %v184 = vsel %vm120, 1, 0
  %v185 = vsel %vm121, 1, 0
  %v186 = vsel %vm122, 1, 0
  %v187 = vsel %vm123, 1, 0
  %v188 = vsel %vm124, 1, 0
  %v189 = vsel %vm125, 1, 0
  %v190 = vsel %vm126, 1, 0
  %v191 = vsel %vm127, 1, 0
  %v192 = vsel %vm128, 1, 0
  %v193 = vsel %vm129, 1, 0
  %v194 = vsel %vm130, 1, 0
  %v195 = vsel %vm131, 1, 0
  %v196 = vsel %vm132, 1, 0
  %v197 = vsel %vm133, 1, 0
  %v198 = vsel %vm134, 1, 0
  %v199 = vsel %vm135, 1, 0
  %v200 = vsel %vm136, 1, 0
  %v201 = vsel %vm137, 1, 0
  %v202 = vsel %vm138, 1, 0
  %v203 = vsel %vm139, 1, 0
  %v204 = vsel %vm140, 1, 0
  %v205 = vsel %vm141, 1, 0
  %v206 = vsel %vm142, 1, 0
  %v207 = vsel %vm143, 1, 0
  %v208 = vsel %vm144, 1, 0
  %v209 = vsel %vm145, 1, 0
  %v210 = vsel %vm146, 1, 0
  %v211 = vsel %vm147, 1, 0
  %v212 = vsel %vm148, 1, 0
  %v213 = vsel %vm149, 1, 0
  %v214 = vsel %vm150, 1, 0
  %v215 = vsel %vm151, 1, 0
  %v216 = vsel %vm152, 1, 0
  %v217 = vsel %vm153, 1, 0
  %v218 = vsel %vm154, 1, 0
  %v219 = vsel %vm155, 1, 0
  %v220 = vsel %vm156, 1, 0
  %v221 = vcvt.s32.f32 %v157
  %v222 = vcvt.s32.f32 %v158
  %v223 = vcvt.s32.f32 %v159
  %v224 = vcvt.s32.f32 %v160
  %v225 = vcvt.s32.f32 %v161
  %v226 = vcvt.s32.f32 %v162
  %v227 = vcvt.s32.f32 %v163
  %v228 = vcvt.s32.f32 %v164
  %v229 = vcvt.s32.f32 %v165
  %v230 = vcvt.s32.f32 %v166
  %v231 = vcvt.s32.f32 %v167
  %v232 = vcvt.s32.f32 %v168
  %v233 = vcvt.s32.f32 %v169
  %v234 = vcvt.s32.f32 %v170
  %v235 = vcvt.s32.f32 %v171
  %v236 = vcvt.s32.f32 %v172
  %v237 = vcvt.s32.f32 %v173
  %v238 = vcvt.s32.f32 %v174
  %v239 = vcvt.s32.f32 %v175
  %v240 = vcvt.s32.f32 %v176
  %v241 = vcvt.s32.f32 %v177
  %v242 = vcvt.s32.f32 %v178
  %v243 = vcvt.s32.f32 %v179
  %v244 = vcvt.s32.f32 %v180
  %v245 = vcvt.s32.f32 %v181
  %v246 = vcvt.s32.f32 %v182
  %v247 = vcvt.s32.f32 %v183
  %v248 = vcvt.s32.f32 %v184
  %v249 = vcvt.s32.f32 %v185
  %v250 = vcvt.s32.f32 %v186
  %v251 = vcvt.s32.f32 %v187
  %v252 = vcvt.s32.f32 %v188
  %v253 = vcvt.s32.f32 %v189
  %v254 = vcvt.s32.f32 %v190
  %v255 = vcvt.s32.f32 %v191
  %v256 = vcvt.s32.f32 %v192
  %v257 = vcvt.s32.f32 %v193
  %v258 = vcvt.s32.f32 %v194
  %v259 = vcvt.s32.f32 %v195
  %v260 = vcvt.s32.f32 %v196
  %v261 = vcvt.s32.f32 %v197
  %v262 = vcvt.s32.f32 %v198
  %v263 = vcvt.s32.f32 %v199
  %v264 = vcvt.s32.f32 %v200
  %v265 = vcvt.s32.f32 %v201
  %v266 = vcvt.s32.f32 %v202
  %v267 = vcvt.s32.f32 %v203
  %v268 = vcvt.s32.f32 %v204
  %v269 = vcvt.s32.f32 %v205
  %v270 = vcvt.s32.f32 %v206
  %v271 = vcvt.s32.f32 %v207
  %v272 = vcvt.s32.f32 %v208
  %v273 = vcvt.s32.f32 %v209
  %v274 = vcvt.s32.f32 %v210
  %v275 = vcvt.s32.f32 %v211
  %v276 = vcvt.s32.f32 %v212
  %v277 = vcvt.s32.f32 %v213
  %v278 = vcvt.s32.f32 %v214
  %v279 = vcvt.s32.f32 %v215
  %v280 = vcvt.s32.f32 %v216
  %v281 = vcvt.s32.f32 %v217
  %v282 = vcvt.s32.f32 %v218
  %v283 = vcvt.s32.f32 %v219
  %v284 = vcvt.s32.f32 %v220
  %v285 = vld [vmem:[#allocation2] sm:$0xff]
  %v286 = vld [vmem:[#allocation2 + $0x8] sm:$0xff]
  %v287 = vld [vmem:[%s1] sm:$0xff]
  %v288 = vld [vmem:[%s1 + $0x8] sm:$0xff]
  %289 = vmatprep.subr.mxu0 %v222
  %290 = vmatpush1.msra.mxu0 %v221
  %291 = vmatprep.subr.mxu0 %v224
  %292 = vmatpush1.msra.mxu0 %v223
  %293 = vmatprep.subr.mxu0 %v226
  %294 = vmatpush1.msra.mxu0 %v225
  %295 = vmatprep.subr.mxu0 %v228
  %296 = vmatpush1.msra.mxu0 %v227
  %297 = vmatprep.subr.mxu0 %v230
  %298 = vmatpush1.msra.mxu0 %v229
  %299 = vmatprep.subr.mxu0 %v232
  %300 = vmatpush1.msra.mxu0 %v231
  %301 = vmatprep.subr.mxu0 %v234
  %302 = vmatpush1.msra.mxu0 %v233
  %303 = vmatprep.subr.mxu0 %v236
  %304 = vmatpush1.msra.mxu0 %v235
  %305 = vmatprep.subr.mxu0 %v238
  %306 = vmatpush1.msra.mxu0 %v237
  %307 = vmatprep.subr.mxu0 %v240
  %308 = vmatpush1.msra.mxu0 %v239
  %309 = vmatprep.subr.mxu0 %v242
  %310 = vmatpush1.msra.mxu0 %v241
  %311 = vmatprep.subr.mxu0 %v244
  %312 = vmatpush1.msra.mxu0 %v243
  %313 = vmatprep.subr.mxu0 %v246
  %314 = vmatpush1.msra.mxu0 %v245
  %315 = vmatprep.subr.mxu0 %v248
  %316 = vmatpush1.msra.mxu0 %v247
  %317 = vmatprep.subr.mxu0 %v250
  %318 = vmatpush1.msra.mxu0 %v249
  %319 = vmatprep.subr.mxu0 %v252
  %320 = vmatpush1.msra.mxu0 %v251
  %321 = vmatprep.subr.mxu0 %v254
  %322 = vmatpush1.msra.mxu0 %v253
  %323 = vmatprep.subr.mxu0 %v256
  %324 = vmatpush1.msra.mxu0 %v255
  %325 = vmatprep.subr.mxu0 %v258
  %326 = vmatpush1.msra.mxu0 %v257
  %327 = vmatprep.subr.mxu0 %v260
  %328 = vmatpush1.msra.mxu0 %v259
  %329 = vmatprep.subr.mxu0 %v262
  %330 = vmatpush1.msra.mxu0 %v261
  %331 = vmatprep.subr.mxu0 %v264
  %332 = vmatpush1.msra.mxu0 %v263
  %333 = vmatprep.subr.mxu0 %v266
  %334 = vmatpush1.msra.mxu0 %v265
  %335 = vmatprep.subr.mxu0 %v268
  %336 = vmatpush1.msra.mxu0 %v267
  %337 = vmatprep.subr.mxu0 %v270
  %338 = vmatpush1.msra.mxu0 %v269
  %339 = vmatprep.subr.mxu0 %v272
  %340 = vmatpush1.msra.mxu0 %v271
  %341 = vmatprep.subr.mxu0 %v274
  %342 = vmatpush1.msra.mxu0 %v273
  %343 = vmatprep.subr.mxu0 %v276
  %344 = vmatpush1.msra.mxu0 %v275
  %345 = vmatprep.subr.mxu0 %v278
  %346 = vmatpush1.msra.mxu0 %v277
  %347 = vmatprep.subr.mxu0 %v280
  %348 = vmatpush1.msra.mxu0 %v279
  %349 = vmatprep.subr.mxu0 %v282
  %350 = vmatpush1.msra.mxu0 %v281
  %351 = vmatprep.subr.mxu0 %v284
  %352 = vmatpush1.msra.mxu0 %v283
  %353 = vmatprep.mubr.f32.mxu0 %v288
  %354 = vmatmul.mubr.f32.gmra.mrb[0].mxu0 %v287
  %v355 = vpop.f32.mrb[0].mxu0
  %v356 = vadd.f32 0.0, %v355
  %v357 = vpop.f32.mrb[0].mxu0
  %v358 = vadd.f32 0.0, %v357
  %359 = vdwg.mxu0
  %v360 = vadd.f32 %v285, %v356
  %v361 = vadd.f32 %v286, %v358
  %362 = vst [vmem:[#allocation2] sm:$0xff] %v360
  %363 = vst [vmem:[#allocation2 + $0x8] sm:$0xff] %v361
  // Predicated region
  $region14: #{deformable_grid.1} parent=0 // pred_check
    %p364 = pneg %p11
  $region15: #{deformable_grid.1} parent=0 // pred_check_branch
    %366 = sbr.rel (%p364) target = $region17
  $region16: #{deformable_grid.1} parent=0 // pred_region
    %v367 = vld [vmem:[#allocation2] sm:$0xff]
    %v368 = vld [vmem:[#allocation2 + $0x8] sm:$0xff]
    %369 = vst [vmem:[%s2] sm:$0xff] %v367
    %370 = vst [vmem:[%s2 + $0x8] sm:$0xff] %v368
  $region17: #{deformable_grid.1} parent=0 // pred_fallthru
    _
  // Predicated region
  $region18: #{deformable_grid.1} parent=0 // pred_check
    _
  $region19: #{deformable_grid.1} parent=0 // pred_check_branch
    %372 = sbr.rel (0) target = $region21
  $region20: #{deformable_grid.1} parent=0 // pred_region
    _
  $region21: #{deformable_grid.1} parent=0 // pred_fallthru
    _
  // Predicated region
  $region22: #{deformable_grid.1} parent=0 // pred_check
    _
  $region23: #{deformable_grid.1} parent=0 // pred_check_branch
    %374 = sbr.rel (0) target = $region25
  $region24: #{deformable_grid.1} parent=0 // pred_region
    _
  $region25: #{deformable_grid.1} parent=0 // pred_fallthru
    _

</llo_original>
